<compile_context>
chip_gen: v7x
topology: tpu7x:2x2x1
jax: 0.10.0
libtpu: 0.0.40
codegen_flags: <defaults>
</compile_context>

<pallas_src>
import functools
import math

import jax
import jax.numpy as jnp
from jax.experimental import pallas as pl
from jax.experimental.pallas import tpu as pltpu


def _round_up(v, m):
    return (v + m - 1) // m * m


def _vmem_capacity_bytes():
    """Per-TensorCore VMEM capacity; v7x-safe fallback if the query fails."""
    try:
        info = pltpu.get_tpu_info()
        cap = getattr(info, "vmem_capacity_bytes", None)
        if cap:
            return int(cap)
    except Exception:
        pass
    return 64 << 20


def _mdn_fused_kernel(x_ref, w_ref, b_ref, out_ref, *, G, GO, approx_recip):
    """Fused pi/mu/sigma head.

    Fused column (lane) layout: [0,G) pi | [G,G+GO) mu | [G+GO,G+2GO) sigma | pad.
    """
    # In-kernel operand cast (free VALU work next to the MXU op).
    x = x_ref[...].astype(w_ref.dtype)
    # Single MXU matmul, f32 accumulate; bias add in f32.
    z = jnp.dot(x, w_ref[...], preferred_element_type=jnp.float32) + b_ref[...]

    col = jax.lax.broadcasted_iota(jnp.int32, z.shape, 1)
    pi_mask = col < G
    sig_mask = (col >= G + GO) & (col < G + 2 * GO)

    # Masked, max-stabilized softmax over the pi lanes (lane-parallel).
    pi_logits = jnp.where(pi_mask, z, -jnp.inf)
    m = jnp.max(pi_logits, axis=-1, keepdims=True)
    e = jnp.exp(pi_logits - m)                    # exp(-inf) = 0 off the pi lanes
    denom = jnp.sum(e, axis=-1, keepdims=True)
    pi_vals = e * pl.reciprocal(denom, approx=approx_recip)

    # exp() only on sigma lanes (zeros elsewhere -> exp(0)=1, discarded by the
    # select), so mu/pad lanes cannot overflow to inf.
    sigma_vals = jnp.exp(jnp.where(sig_mask, z, 0.0))

    out_ref[...] = jnp.where(pi_mask, pi_vals,
                             jnp.where(sig_mask, sigma_vals, z)
                             ).astype(out_ref.dtype)


def pack_mdn_params(params, num_gaussians, output_dim, *,
                    compute_dtype=jnp.bfloat16):
    """Pack the three heads column-wise as [pi | mu | sigma | optional pad].

    Call ONCE per parameter set (hoisted out of the per-call path).
    Returns (w_fused[compute_dtype], b_fused[f32]).
    """
    G, OD = num_gaussians, output_dim
    GO = G * OD
    Nf = G + 2 * GO
    Npad = _round_up(Nf, 128)
    # Lane-dense 128-wide stores only pay off when the pad overhead is small;
    # otherwise keep the natural width (narrow masked stores beat Npad/Nf
    # extra writeback DMA).
    Nout = Npad if 2 * Nf >= Npad else Nf

    w_pi, b_pi, w_sig, b_sig, w_mu, b_mu = params
    Din = w_pi.shape[0]

    w_fused = jnp.zeros((Din, Nout), jnp.float32)
    w_fused = w_fused.at[:, :G].set(w_pi)
    w_fused = w_fused.at[:, G:G + GO].set(w_mu)
    w_fused = w_fused.at[:, G + GO:G + 2 * GO].set(w_sig)

    b_fused = jnp.zeros((1, Nout), jnp.float32)
    b_fused = b_fused.at[:, :G].set(b_pi.reshape(1, G))
    b_fused = b_fused.at[:, G:G + GO].set(b_mu.reshape(1, GO))
    b_fused = b_fused.at[:, G + GO:G + 2 * GO].set(b_sig.reshape(1, GO))
    return w_fused.astype(compute_dtype), b_fused


def mixture_density_decoder(x, w_fused, b_fused, *, num_gaussians, output_dim,
                            approx_recip=True, out_dtype=jnp.float32):
    """Forward pass of MixtureDensityDecoder. Returns (pi, mu, sigma)."""
    B, Din = x.shape
    G, OD = num_gaussians, output_dim
    GO = G * OD
    Nout = w_fused.shape[1]
    assert Nout >= G + 2 * GO

    x_isz = jnp.dtype(x.dtype).itemsize
    w_isz = jnp.dtype(w_fused.dtype).itemsize
    o_isz = jnp.dtype(out_dtype).itemsize

    # Row alignment follows the sublane packing of the streamed arrays (x is
    # streamed in its HBM dtype and cast in-kernel, so f32 -> 8; a 16-bit
    # stream would require 16, int8/fp8 -> 32).
    row_align = 8 * max(1, 4 // min(x_isz, o_isz))

    # Generation-aware VMEM budget: 3/4 of capacity (48 MiB on v7x's 64 MiB/TC,
    # 96 MiB on 128 MiB v5e/v6e parts).
    budget = _vmem_capacity_bytes() * 3 // 4

    # Resident packed weight/bias counted at 2x (double-buffer safe even if the
    # constant-index_map block gets double-buffered).
    resident = 2 * Din * Nout * w_isz + 2 * Nout * 4

    def tile_bytes(tb):
        return resident + 2 * tb * Din * x_isz + 2 * tb * Nout * o_isz

    tb = row_align
    for cand in (16, 32, 64, 128, 256, 512, 1024, 2048):
        if cand % row_align:
            continue
        if tile_bytes(cand) <= budget - (8 << 20):
            tb = cand
    TB = max(row_align, min(tb, _round_up(B, row_align)))
    grid = (pl.cdiv(B, TB),)

    vmem_limit = int(min(budget, max(tile_bytes(TB) + (8 << 20), 16 << 20)))

    cost = pl.CostEstimate(
        flops=2 * B * Din * Nout,
        transcendentals=2 * B * Nout,
        bytes_accessed=(B * Din * x_isz + Din * Nout * w_isz
                        + Nout * 4 + B * Nout * o_isz),
    )

    fused_out = pl.pallas_call(
        functools.partial(_mdn_fused_kernel, G=G, GO=GO,
                          approx_recip=approx_recip),
        out_shape=jax.ShapeDtypeStruct((B, Nout), out_dtype),
        grid=grid,
        in_specs=[
            pl.BlockSpec((TB, Din), lambda i: (i, 0)),      # streamed x tiles
            pl.BlockSpec((Din, Nout), lambda i: (0, 0)),    # resident packed W
            pl.BlockSpec((1, Nout), lambda i: (0, 0)),      # resident bias (f32)
        ],
        out_specs=pl.BlockSpec((TB, Nout), lambda i: (i, 0)),
        compiler_params=pltpu.CompilerParams(
            dimension_semantics=("parallel",),
            vmem_limit_bytes=vmem_limit,
        ),
        cost_estimate=cost,
    )(x, w_fused, b_fused)

    # Glue: slice the fused output and reshape, as in the PyTorch forward.
    pi = fused_out[:, :G]
    mu = fused_out[:, G:G + GO].reshape(B, G, OD)
    sigma = fused_out[:, G + GO:G + 2 * GO].reshape(B, G, OD)
    return pi, mu, sigma


def init_params(key, input_dim, num_gaussians, output_dim):
    """Deterministic synthetic parameter init (mirrors the module's shapes).

    pi:    Linear(input_dim, G)        torch-style scaled-uniform init
    sigma: Linear(input_dim, G*OD)     weight ~ Normal(0,1)  (nn.init.normal_)
    mu:    Linear(input_dim, G*OD)     weight ~ Normal(0,1)  (nn.init.normal_)
    Weights stored as (in_features, out_features) so kernels do x @ W + b.
    """
    G, OD = num_gaussians, output_dim
    GO = G * OD
    k = jax.random.split(key, 6)
    bound = 1.0 / math.sqrt(input_dim)
    w_pi = jax.random.uniform(k[0], (input_dim, G), jnp.float32, -bound, bound)
    b_pi = jax.random.uniform(k[1], (1, G), jnp.float32, -bound, bound)
    w_sig = jax.random.normal(k[2], (input_dim, GO), jnp.float32)
    b_sig = jax.random.uniform(k[3], (1, GO), jnp.float32, -bound, bound)
    w_mu = jax.random.normal(k[4], (input_dim, GO), jnp.float32)
    b_mu = jax.random.uniform(k[5], (1, GO), jnp.float32, -bound, bound)
    return (w_pi, b_pi, w_sig, b_sig, w_mu, b_mu)


def _reference_forward(x, params, compute_dtype=jnp.float32):
    """Pure-JAX reference (same operand dtype / f32 accumulate as the kernel)."""
    w_pi, b_pi, w_sig, b_sig, w_mu, b_mu = params
    xc = x.astype(compute_dtype)
    dot = lambda a, w: jnp.dot(a, w.astype(compute_dtype),
                               preferred_element_type=jnp.float32)
    pi = jax.nn.softmax(dot(xc, w_pi) + b_pi, axis=1)
    mu = dot(xc, w_mu) + b_mu
    sigma = jnp.exp(dot(xc, w_sig) + b_sig)
    return pi, mu, sigma


if __name__ == "__main__":
    input_dim = 32
    num_gaussians = 2
    output_dim = 2
    batch = 8

    key = jax.random.PRNGKey(0)
    kx, kp, kx2 = jax.random.split(key, 3)
    x = jax.random.normal(kx, (batch, input_dim), jnp.float32)
    params = init_params(kp, input_dim, num_gaussians, output_dim)

    # --- f32 operands, exact reciprocal: tight check vs pure-JAX reference ---
    w32, b32 = pack_mdn_params(params, num_gaussians, output_dim,
                               compute_dtype=jnp.float32)
    fwd32 = jax.jit(functools.partial(mixture_density_decoder,
                                      num_gaussians=num_gaussians,
                                      output_dim=output_dim,
                                      approx_recip=False))
    pi, mu, sigma = fwd32(x, w32, b32)
    jax.block_until_ready((pi, mu, sigma))
    pi_r, mu_r, sigma_r = _reference_forward(x, params, jnp.float32)
    mu_r = mu_r.reshape(batch, num_gaussians, output_dim)
    sigma_r = sigma_r.reshape(batch, num_gaussians, output_dim)
    assert pi.shape == (batch, num_gaussians)
    assert mu.shape == (batch, num_gaussians, output_dim)
    assert sigma.shape == (batch, num_gaussians, output_dim)
    assert jnp.allclose(pi, pi_r, atol=1e-5, rtol=1e-5)
    assert jnp.allclose(mu, mu_r, atol=1e-5, rtol=1e-5)
    assert jnp.allclose(sigma, sigma_r, atol=1e-4, rtol=1e-4)

    # --- bf16 operands + approx softmax reciprocal (default fast path) ---
    w16, b16 = pack_mdn_params(params, num_gaussians, output_dim,
                               compute_dtype=jnp.bfloat16)
    fwd16 = jax.jit(functools.partial(mixture_density_decoder,
                                      num_gaussians=num_gaussians,
                                      output_dim=output_dim,
                                      approx_recip=True))
    pi_b, mu_b, sigma_b = fwd16(x, w16, b16)
    jax.block_until_ready((pi_b, mu_b, sigma_b))
    pi_rb, mu_rb, sigma_rb = _reference_forward(x, params, jnp.bfloat16)
    mu_rb = mu_rb.reshape(batch, num_gaussians, output_dim)
    sigma_rb = sigma_rb.reshape(batch, num_gaussians, output_dim)
    assert jnp.allclose(pi_b, pi_rb, atol=2e-3, rtol=2e-2)
    assert jnp.allclose(mu_b, mu_rb, atol=1e-3, rtol=2e-2)
    assert jnp.allclose(sigma_b, sigma_rb, atol=2e-3, rtol=2e-2)

    # --- ragged batch: exercises the no-pad cdiv grid / clipped last block ---
    x13 = jax.random.normal(kx2, (13, input_dim), jnp.float32)
    pi13, mu13, sigma13 = fwd32(x13, w32, b32)
    jax.block_until_ready((pi13, mu13, sigma13))
    pi13_r, mu13_r, sigma13_r = _reference_forward(x13, params, jnp.float32)
    assert jnp.allclose(pi13, pi13_r, atol=1e-5, rtol=1e-5)
    assert jnp.allclose(mu13, mu13_r.reshape(13, num_gaussians, output_dim),
                        atol=1e-5, rtol=1e-5)
    assert jnp.allclose(sigma13, sigma13_r.reshape(13, num_gaussians, output_dim),
                        atol=1e-4, rtol=1e-4)

    print("KERNEL_OK")
</pallas_src>

<mosaic_0001>
module attributes {stable_mosaic.version = 11 : i64} {
  func.func @_mdn_fused_kernel(%arg0: i32, %arg1: memref<8x32xf32, #tpu.memory_space<vmem>>, %arg2: memref<32x10xf32, #tpu.memory_space<vmem>>, %arg3: memref<1x10xf32, #tpu.memory_space<vmem>>, %arg4: memref<8x10xf32, #tpu.memory_space<vmem>>) attributes {dimension_semantics = [#tpu.dimension_semantics<parallel>], iteration_bounds = array<i64: 1>, scalar_prefetch = 0 : i64, scratch_operands = 0 : i64, tpu.core_type = #tpu.core_type<tc>, window_params = [{transform_indices = @transform_0, window_bounds = array<i64: 8, 32>}, {pipeline_mode = #tpu.pipeline_mode<synchronous>, transform_indices = @transform_1, window_bounds = array<i64: 32, 10>}, {pipeline_mode = #tpu.pipeline_mode<synchronous>, transform_indices = @transform_2, window_bounds = array<i64: 1, 10>}, {transform_indices = @transform_3, window_bounds = array<i64: 8, 10>}]} {
    %c0 = arith.constant 0 : index
    %c0_0 = arith.constant 0 : index
    %0 = vector.load %arg1[%c0, %c0_0] : memref<8x32xf32, #tpu.memory_space<vmem>>, vector<8x32xf32>
    %c0_1 = arith.constant 0 : index
    %c0_2 = arith.constant 0 : index
    %1 = vector.load %arg2[%c0_1, %c0_2] : memref<32x10xf32, #tpu.memory_space<vmem>>, vector<32x10xf32>
    %cst = arith.constant dense<0.000000e+00> : vector<8x10xf32>
    %2 = tpu.matmul %0, %1, %cst {dimension_numbers = #tpu.dot_dimension_numbers<[1], [0], [0], [1], [0, 0, 1, 1], [], []>} : vector<8x32xf32>, vector<32x10xf32>, vector<8x10xf32> -> vector<8x10xf32>
    %c0_3 = arith.constant 0 : index
    %c0_4 = arith.constant 0 : index
    %3 = vector.load %arg3[%c0_3, %c0_4] : memref<1x10xf32, #tpu.memory_space<vmem>>, vector<1x10xf32>
    %4 = vector.broadcast %3 : vector<1x10xf32> to vector<8x10xf32>
    %5 = arith.addf %2, %4 : vector<8x10xf32>
    %6 = tpu.iota {dimensions = array<i32: 1>} : vector<8x10xi32>
    %c2_i32 = arith.constant 2 : i32
    %7 = vector.broadcast %c2_i32 : i32 to vector<8x10xi32>
    %8 = arith.cmpi slt, %6, %7 : vector<8x10xi32>
    %c6_i32 = arith.constant 6 : i32
    %9 = vector.broadcast %c6_i32 : i32 to vector<8x10xi32>
    %10 = arith.cmpi sge, %6, %9 : vector<8x10xi32>
    %c10_i32 = arith.constant 10 : i32
    %11 = vector.broadcast %c10_i32 : i32 to vector<8x10xi32>
    %12 = arith.cmpi slt, %6, %11 : vector<8x10xi32>
    %13 = arith.andi %10, %12 : vector<8x10xi1>
    %cst_5 = arith.constant 0xFF800000 : f32
    %14 = vector.broadcast %cst_5 : f32 to vector<8x10xf32>
    %15 = arith.select %8, %5, %14 : vector<8x10xi1>, vector<8x10xf32>
    %cst_6 = arith.constant dense<0xFF800000> : vector<8xf32>
    %16 = vector.multi_reduction <maximumf>, %15, %cst_6 [1] : vector<8x10xf32> to vector<8xf32>
    %17 = vector.shape_cast %16 : vector<8xf32> to vector<8x1xf32>
    %18 = vector.broadcast %17 : vector<8x1xf32> to vector<8x10xf32>
    %19 = arith.subf %15, %18 : vector<8x10xf32>
    %20 = math.exp %19 : vector<8x10xf32>
    %cst_7 = arith.constant dense<0.000000e+00> : vector<8xf32>
    %21 = vector.multi_reduction <add>, %20, %cst_7 [1] : vector<8x10xf32> to vector<8xf32>
    %22 = vector.shape_cast %21 : vector<8xf32> to vector<8x1xf32>
    %23 = tpu.reciprocal %22 : vector<8x1xf32> -> vector<8x1xf32>
    %24 = vector.broadcast %23 : vector<8x1xf32> to vector<8x10xf32>
    %25 = arith.mulf %20, %24 : vector<8x10xf32>
    %cst_8 = arith.constant 0.000000e+00 : f32
    %26 = vector.broadcast %cst_8 : f32 to vector<8x10xf32>
    %27 = arith.select %13, %5, %26 : vector<8x10xi1>, vector<8x10xf32>
    %28 = math.exp %27 : vector<8x10xf32>
    %29 = arith.select %13, %28, %5 : vector<8x10xi1>, vector<8x10xf32>
    %30 = arith.select %8, %25, %29 : vector<8x10xi1>, vector<8x10xf32>
    %c0_9 = arith.constant 0 : index
    %c0_10 = arith.constant 0 : index
    %31 = vector.load %arg4[%c0_9, %c0_10] : memref<8x10xf32, #tpu.memory_space<vmem>>, vector<8x10xf32>
    tpu.vector_store %arg4[%c0_9, %c0_10], %30 {strides = array<i32>} : memref<8x10xf32, #tpu.memory_space<vmem>>, vector<8x10xf32>,
    return
  }
  func.func @transform_0(%arg0: i32) -> (i32, i32) {
    %c0_i32 = arith.constant 0 : i32
    %c0_i32_0 = arith.constant 0 : i32
    return %arg0, %c0_i32 : i32, i32
  }
  func.func @transform_1(%arg0: i32) -> (i32, i32) {
    %c0_i32 = arith.constant 0 : i32
    %c0_i32_0 = arith.constant 0 : i32
    %c0_i32_1 = arith.constant 0 : i32
    return %c0_i32, %c0_i32_0 : i32, i32
  }
  func.func @transform_2(%arg0: i32) -> (i32, i32) {
    %c0_i32 = arith.constant 0 : i32
    %c0_i32_0 = arith.constant 0 : i32
    %c0_i32_1 = arith.constant 0 : i32
    return %c0_i32, %c0_i32_0 : i32, i32
  }
  func.func @transform_3(%arg0: i32) -> (i32, i32) {
    %c0_i32 = arith.constant 0 : i32
    %c0_i32_0 = arith.constant 0 : i32
    return %arg0, %c0_i32 : i32, i32
  }
}

</mosaic_0001>

<llo_original>
// kernel: mixture_density_decoder.1
$region0: #{mixture_density_decoder.1}
  #allocation0 [shape = 'u32[]', space=smem, size = 0x4, offset = 0x4, fixed_abs, tag = 'smem constant byte address 0x4 - core index']
  #allocation1 [shape = 'u32[144,128]{1,0:T(1,128)}', space=vmem, size = 0x12000, scoped, tag = 'internal scratch']
  %s0 = inlined_call_operand.vmem [shape: f32[8,32], index: 0, kind: input, shape index: {}]
  %s1 = inlined_call_operand.vmem [shape: f32[32,10], index: 1, kind: input, shape index: {}]
  %s2 = inlined_call_operand.vmem [shape: f32[1,10], index: 2, kind: input, shape index: {}]
  %s3 = inlined_call_operand.vmem [shape: f32[8,10], index: 3, kind: output, shape index: {}]
  %s4 = sld [smem:[#allocation0]]
  $region22: #{mixture_density_decoder.1} parent=0
    _
  %s6 = ssub.s32 1, %s4
  %s7 = scalar_select 0, %s6, %s4
  // Predicated region
  $region2: #{mixture_density_decoder.1} parent=0 // pred_check
    _
  $region3: #{mixture_density_decoder.1} parent=0 // pred_check_branch
    %9 = sbr.rel (0) target = $region5
  $region4: #{mixture_density_decoder.1} parent=0 // pred_region
    _
  $region5: #{mixture_density_decoder.1} parent=0 // pred_fallthru
    _
  // Predicated region
  $region6: #{mixture_density_decoder.1} parent=0 // pred_check
    _
  $region7: #{mixture_density_decoder.1} parent=0 // pred_check_branch
    %11 = sbr.rel (0) target = $region9
  $region8: #{mixture_density_decoder.1} parent=0 // pred_region
    _
  $region9: #{mixture_density_decoder.1} parent=0 // pred_fallthru
    _
  // Predicated region
  $region10: #{mixture_density_decoder.1} parent=0 // pred_check
    _
  $region11: #{mixture_density_decoder.1} parent=0 // pred_check_branch
    %13 = sbr.rel (0) target = $region13
  $region12: #{mixture_density_decoder.1} parent=0 // pred_region
    _
  $region13: #{mixture_density_decoder.1} parent=0 // pred_fallthru
    _
  %v14 = vld [vmem:[%s0] sm:$0xff]
  %v15 = vld [vmem:[%s1] sm:$0xff]
  %v16 = vld [vmem:[%s1 + $0x8] sm:$0xff]
  %v17 = vld [vmem:[%s1 + $0x10] sm:$0xff]
  %v18 = vld [vmem:[%s1 + $0x18] sm:$0xff]
  %v19 = vld [vmem:[%s2] sm:$0x1]
  %v21 = vlaneseq
  %v22 = vshrl.u32 %v21, 7
  %v23 = vsub.s32 0, %v22
  %v24 = vrot.slane %v19, %v23
  %vm26 = vcmask 261120
  %v28 = vsel %vm26, %v14, 0
  %30 = vmatprep.subr.mxu0 0.0
  %31 = vmatpush1.msra.mxu0 %v15
  %32 = vmatprep.subr.mxu0 0.0
  %33 = vmatpush1.msra.mxu0 %v16
  %34 = vmatprep.subr.mxu0 0.0
  %35 = vmatpush1.msra.mxu0 %v17
  %36 = vmatprep.subr.mxu0 0.0
  %37 = vmatpush1.msra.mxu0 %v18
  %38 = vmatprep.subr.mxu0 0.0
  %39 = vmatpush1.msra.mxu0 0.0
  %40 = vmatprep.subr.mxu0 0.0
  %41 = vmatpush1.msra.mxu0 0.0
  %42 = vmatprep.subr.mxu0 0.0
  %43 = vmatpush1.msra.mxu0 0.0
  %44 = vmatprep.subr.mxu0 0.0
  %45 = vmatpush1.msra.mxu0 0.0
  %46 = vmatprep.subr.mxu0 0.0
  %47 = vmatpush1.msra.mxu0 0.0
  %48 = vmatprep.subr.mxu0 0.0
  %49 = vmatpush1.msra.mxu0 0.0
  %50 = vmatprep.subr.mxu0 0.0
  %51 = vmatpush1.msra.mxu0 0.0
  %52 = vmatprep.subr.mxu0 0.0
  %53 = vmatpush1.msra.mxu0 0.0
  %54 = vmatprep.subr.mxu0 0.0
  %55 = vmatpush1.msra.mxu0 0.0
  %56 = vmatprep.subr.mxu0 0.0
  %57 = vmatpush1.msra.mxu0 0.0
  %58 = vmatprep.subr.mxu0 0.0
  %59 = vmatpush1.msra.mxu0 0.0
  %60 = vmatprep.subr.mxu0 0.0
  %61 = vmatpush1.msra.mxu0 0.0
  %62 = vmatprep.subr.mxu0 0.0
  %63 = vmatpush1.msra.mxu0 0.0
  %64 = vmatprep.subr.mxu0 0.0
  %65 = vmatpush1.msra.mxu0 0.0
  %66 = vmatprep.subr.mxu0 0.0
  %67 = vmatpush1.msra.mxu0 0.0
  %68 = vmatprep.subr.mxu0 0.0
  %69 = vmatpush1.msra.mxu0 0.0
  %70 = vmatprep.subr.mxu0 0.0
  %71 = vmatpush1.msra.mxu0 0.0
  %72 = vmatprep.subr.mxu0 0.0
  %73 = vmatpush1.msra.mxu0 0.0
  %74 = vmatprep.subr.mxu0 0.0
  %75 = vmatpush1.msra.mxu0 0.0
  %76 = vmatprep.subr.mxu0 0.0
  %77 = vmatpush1.msra.mxu0 0.0
  %78 = vmatprep.subr.mxu0 0.0
  %79 = vmatpush1.msra.mxu0 0.0
  %80 = vmatprep.subr.mxu0 0.0
  %81 = vmatpush1.msra.mxu0 0.0
  %82 = vmatprep.subr.mxu0 0.0
  %83 = vmatpush1.msra.mxu0 0.0
  %84 = vmatprep.subr.mxu0 0.0
  %85 = vmatpush1.msra.mxu0 0.0
  %86 = vmatprep.subr.mxu0 0.0
  %87 = vmatpush1.msra.mxu0 0.0
  %88 = vmatprep.subr.mxu0 0.0
  %89 = vmatpush1.msra.mxu0 0.0
  %90 = vmatprep.subr.mxu0 0.0
  %91 = vmatpush1.msra.mxu0 0.0
  %92 = vmatprep.subr.mxu0 0.0
  %93 = vmatpush1.msra.mxu0 0.0
  %94 = vmatprep.mubr.f32.mxu0 0.0
  %95 = vmatmul.mubr.f32.gmra.mrb[0].mxu0 %v28
  %v96 = vpop.f32.mrb[0].mxu0
  %v97 = vadd.f32 %v24, %v96
  %v98 = vpop.f32.mrb[0].mxu0
  %99 = vdwg.mxu0
  %v100 = vlaneseq
  %v101 = vand.u32 %v100, 127
  %vm102 = vcmp.lt.s32.totalorder %v101, 2
  %vm103 = vcmp.ge.s32.totalorder %v101, 6
  %vm104 = vcmp.lt.s32.totalorder %v101, 10
  %vm105 = vmand %vm103, %vm104
  %v106 = vsel %vm102, %v97, -inf
  %vm107 = vcmask 80896
  %v108 = vsel %vm107, %v106, -inf
  %109 = vmax.xlane.f32.xlu0 %v108
  %v110 = vpop.xlane.xlu0 %109
  %v111 = vsub.f32 %v106, %v110
  %v112 = vmul.f32 %v111, 1.442695
  %v113 = vpow.pop %v112
  %v114 = vsel %vm107, %v113, 0.0
  %115 = vadd.xlane.f32.xlu0 %v114
  %v116 = vpop.xlane.xlu0 %115
  %v117 = vrcp.pop %v116
  %v118 = vmul.f32 %v113, %v117
  %v119 = vsel %vm105, %v97, 0.0
  %v120 = vmul.f32 %v119, 1.442695
  %v121 = vpow.pop %v120
  %v122 = vsel %vm105, %v121, %v97
  %v123 = vsel %vm102, %v118, %v122
  %124 = vst.msk [vmem:[%s3] sm:$0xff] %vm107, %v123
  // Predicated region
  $region14: #{mixture_density_decoder.1} parent=0 // pred_check
    _
  $region15: #{mixture_density_decoder.1} parent=0 // pred_check_branch
    %126 = sbr.rel (0) target = $region17
  $region16: #{mixture_density_decoder.1} parent=0 // pred_region
    _
  $region17: #{mixture_density_decoder.1} parent=0 // pred_fallthru
    _
  // Predicated region
  $region18: #{mixture_density_decoder.1} parent=0 // pred_check
    _
  $region19: #{mixture_density_decoder.1} parent=0 // pred_check_branch
    %128 = sbr.rel (0) target = $region21
  $region20: #{mixture_density_decoder.1} parent=0 // pred_region
    _
  $region21: #{mixture_density_decoder.1} parent=0 // pred_fallthru
    _

</llo_original>
